<compile_context>
chip_gen: v6e
topology: v6e:2x2x1
jax: 0.10.0
libtpu: 0.0.40
codegen_flags: <defaults>
</compile_context>

<pallas_src>
import functools

import jax
import jax.numpy as jnp
from jax import lax
from jax.experimental import pallas as pl
from jax.experimental.pallas import tpu as pltpu


# ----------------------------- Pallas kernels ------------------------------

def _stats_kernel(inp_ref, w_ref, g_ref, gsum_ref, gsq_ref):
    """Per-group sum(x) and sum(x^2), with x = inputs @ W computed on the MXU.

    The (N, c_out) activation is NOT written to HBM here (kernel B recomputes
    it), so this kernel only streams the narrow inputs and emits two tiny
    (flag, c_out) resident accumulators."""
    @pl.when(pl.program_id(0) == 0)
    def _():
        gsum_ref[...] = jnp.zeros_like(gsum_ref)
        gsq_ref[...] = jnp.zeros_like(gsq_ref)

    x = jnp.dot(inp_ref[...], w_ref[...], preferred_element_type=jnp.float32)
    flag = gsum_ref.shape[0]
    # Onehot built in-kernel from the (tn, 1) int32 group ids (no (N, flag)
    # HBM stream).  Padded rows carry g == flag -> all-zero onehot row.
    oh = (g_ref[...] == lax.broadcasted_iota(jnp.int32, (x.shape[0], flag), 1)
          ).astype(jnp.float32)
    # Contract over the row axis on the MXU.
    # TODO(synk): dump MLIR (pl.lower_as_mlir) to confirm Mosaic does not insert
    # a per-step vxpose of the (tn, flag) operand for this dim0-dim0 contraction.
    dn = (((0,), (0,)), ((), ()))
    gsum_ref[...] += lax.dot_general(oh, x, dn, preferred_element_type=jnp.float32)
    gsq_ref[...] += lax.dot_general(oh, x * x, dn, preferred_element_type=jnp.float32)


def _bn_relu_segmax_kernel(wlo_ref, whi_ref,                 # scalar prefetch (SMEM)
                           inp_ref, w_ref, g_ref, seg_ref,
                           corr_ref, scale_ref, bias_ref,
                           y_ref, xmax_ref, *, rs):
    """y = relu((inputs @ W - corr[group]) * scale + bias), fused with the
    segment max over unq_inv.

    xmax_ref is a lane-dense packed (ceil((S+1)/8), 8*c_out) resident-output
    accumulator: packed row w holds segments [8w, 8w+8), each in c_out lanes.
    Zero-init at the first grid step matches torch_scatter's zero fill because
    y >= 0 post-ReLU (init to -inf + clamp at unpack would be the robust form).
    Rows were pre-sorted by segment id in the wrapper, so the scalar-prefetched
    per-(block, sub-tile) window range [wlo, whi] is narrow."""
    i = pl.program_id(0)

    @pl.when(i == 0)
    def _():
        xmax_ref[...] = jnp.zeros_like(xmax_ref)

    x = jnp.dot(inp_ref[...], w_ref[...], preferred_element_type=jnp.float32)

    # Per-row BN correction: flag-way select from the tiny (flag, c_out) table
    # (no onehot @ corr matmul, no (N, c_out) corr materialization).
    g = g_ref[...]                                           # (tn, 1) int32
    flag = corr_ref.shape[0]
    corr = corr_ref[0:1, :]
    for k in range(1, flag):                                 # flag is tiny & static
        corr = jnp.where(g == k, corr_ref[k:k + 1, :], corr)

    y = jnp.maximum((x - corr) * scale_ref[...] + bias_ref[...], 0.0)
    y_ref[...] = y

    seg = seg_ref[...]                                       # (tn, 1) int32
    tn, c_out = y.shape
    n_sub = tn // rs
    # lane k*c_out..(k+1)*c_out-1 of a packed row belongs to segment s0 + k.
    lane_grp = lax.broadcasted_iota(jnp.int32, (rs, 8 * c_out), 1) // c_out

    for j in range(n_sub):                                   # static row sub-tiles
        y_sub = y[j * rs:(j + 1) * rs, :]
        y_tiled = jnp.concatenate([y_sub] * 8, axis=1)       # (rs, 8*c_out)
        seg_sub = seg[j * rs:(j + 1) * rs, :]
        base = i * n_sub + j

        def window(t, carry, y_tiled=y_tiled, seg_sub=seg_sub):
            mask = seg_sub == (t * 8 + lane_grp)             # (rs, 8*c_out)
            cand = jnp.max(jnp.where(mask, y_tiled, 0.0), axis=0, keepdims=True)
            cur = xmax_ref[pl.ds(t, 1), :]
            xmax_ref[pl.ds(t, 1), :] = jnp.maximum(cur, cand)
            return carry

        # Only sweep the packed-row range actually present in this sub-tile.
        lax.fori_loop(wlo_ref[base], whi_ref[base] + 1, window, 0)


# --------------------------------- wrapper ---------------------------------

def _round_up(x, m):
    return (x + m - 1) // m * m


def _pad_rows(a, n_pad, value=0):
    if n_pad == 0:
        return a
    return jnp.pad(a, ((0, n_pad), (0, 0)), constant_values=value)


def pfn_layer_v1_forward(params, inputs, unq_inv, points, flag, num_segments, *,
                         alpha, use_norm=True, last_layer=False, eps=1e-3,
                         tn=2048, sub_rows=256, matmul_dtype=jnp.bfloat16):
    N, c_in = inputs.shape
    w = params["linear_w"]                        # (c_in, c_out) == torch weight.T
    c_out = w.shape[1]
    g = points[:, 0].astype(jnp.int32)
    seg = unq_inv.astype(jnp.int32)

    # Sort rows by segment id so the per-sub-tile segment-id range in kernel B
    # is narrow.  The segment max is order-invariant; y is gathered back to the
    # original row order at the end.
    perm = jnp.argsort(seg)
    inv_perm = jnp.zeros((N,), jnp.int32).at[perm].set(jnp.arange(N, dtype=jnp.int32))
    inputs_s = inputs[perm]
    g_s = g[perm]
    seg_s = seg[perm]

    # Row tiling: big tiles (HBM-bound kernels), clamped for tiny demo inputs.
    tn = _round_up(max(8, min(tn, _round_up(N, 8))), 8)
    np_ = _round_up(N, tn)
    n_pad = np_ - N
    nblk = np_ // tn
    grid = (nblk,)

    # Sub-tile size for the segment-max sweep (restricts the masked max to rs
    # rows per scalar-prefetched window range).
    rs = _round_up(max(8, min(sub_rows, tn)), 8)
    if tn % rs != 0:
        rs = tn
    n_sub = tn // rs

    inputs_p = _pad_rows(inputs_s, n_pad).astype(matmul_dtype)     # zero rows
    g_p = _pad_rows(g_s[:, None], n_pad, value=flag)               # sentinel group
    seg_p = _pad_rows(seg_s[:, None], n_pad, value=num_segments)   # sentinel segment
    w_mm = w.astype(matmul_dtype)

    # ---- kernel A: per-group BN statistics (gsum, gsq) on the MXU ----
    # TODO(synk): v7x megacore -- give gsum/gsq a core-indexed leading dim, mark
    # the row axis "parallel", and reduce the tiny partials in the wrapper.
    gsum, gsq = pl.pallas_call(
        _stats_kernel,
        out_shape=(jax.ShapeDtypeStruct((flag, c_out), jnp.float32),
                   jax.ShapeDtypeStruct((flag, c_out), jnp.float32)),
        grid_spec=pltpu.PrefetchScalarGridSpec(
            num_scalar_prefetch=0, grid=grid,
            in_specs=[pl.BlockSpec((tn, c_in), lambda i: (i, 0)),
                      pl.BlockSpec((c_in, c_out), lambda i: (0, 0)),
                      pl.BlockSpec((tn, 1), lambda i: (i, 0))],
            out_specs=(pl.BlockSpec((flag, c_out), lambda i: (0, 0)),
                       pl.BlockSpec((flag, c_out), lambda i: (0, 0)))),
        compiler_params=pltpu.CompilerParams(dimension_semantics=("arbitrary",)),
    )(inputs_p, w_mm, g_p)

    # ---- tiny (flag, c_out)-sized XLA math: correction table, scale, bias ----
    if use_norm:
        counts = jnp.sum((g[:, None] == jnp.arange(flag, dtype=jnp.int32)[None, :])
                         .astype(jnp.float32), axis=0)[:, None]     # (flag, 1)
        batch_mean = jnp.sum(gsum, axis=0, keepdims=True) / N       # (1, c_out)
        mean_sq = jnp.sum(gsq, axis=0, keepdims=True) / N
        # E[x^2] - E[x]^2 in f32 with a clamp.  TODO(synk): switch to a shifted /
        # two-pass variance if activation mean >> std ever makes this cancel.
        batch_var = jnp.maximum(mean_sq - batch_mean ** 2, 0.0)     # biased var
        group_mean = gsum / jnp.maximum(counts, 1.0)                # guard empty groups
        mean_diff = group_mean - batch_mean                         # (.detach(): fwd no-op)
        lm = mean_diff @ params["lm_w"].T                           # (flag, c_out)
        corr_table = (batch_mean + alpha * lm).astype(jnp.float32)  # per-group correction
        scale = (params["bn_gamma"][None, :] / jnp.sqrt(batch_var + eps)).astype(jnp.float32)
        bias = params["bn_beta"][None, :].astype(jnp.float32)
        # TODO(synk): running_mean / running_var buffer updates are a training-time
        # side effect only and do not affect the forward output; not materialized.
    else:
        corr_table = jnp.zeros((flag, c_out), jnp.float32)
        scale = jnp.ones((1, c_out), jnp.float32)
        bias = jnp.zeros((1, c_out), jnp.float32)

    # ---- kernel B: linear + BN + ReLU fused with the scatter_max over unq_inv ----
    s_pad8 = (num_segments + 1 + 7) // 8          # packed rows; includes a sentinel slot
    seg_sub_blocks = seg_p.reshape(nblk * n_sub, rs)
    sub_w_lo = (jnp.min(seg_sub_blocks, axis=1) // 8).astype(jnp.int32)
    sub_w_hi = (jnp.max(seg_sub_blocks, axis=1) // 8).astype(jnp.int32)

    y_p, xmax_packed = pl.pallas_call(
        functools.partial(_bn_relu_segmax_kernel, rs=rs),
        out_shape=(jax.ShapeDtypeStruct((np_, c_out), jnp.float32),
                   jax.ShapeDtypeStruct((s_pad8, 8 * c_out), jnp.float32)),
        grid_spec=pltpu.PrefetchScalarGridSpec(
            num_scalar_prefetch=2, grid=grid,
            in_specs=[pl.BlockSpec((tn, c_in), lambda i, *_: (i, 0)),
                      pl.BlockSpec((c_in, c_out), lambda i, *_: (0, 0)),
                      pl.BlockSpec((tn, 1), lambda i, *_: (i, 0)),
                      pl.BlockSpec((tn, 1), lambda i, *_: (i, 0)),
                      pl.BlockSpec((flag, c_out), lambda i, *_: (0, 0)),
                      pl.BlockSpec((1, c_out), lambda i, *_: (0, 0)),
                      pl.BlockSpec((1, c_out), lambda i, *_: (0, 0))],
            out_specs=(pl.BlockSpec((tn, c_out), lambda i, *_: (i, 0)),
                       pl.BlockSpec((s_pad8, 8 * c_out), lambda i, *_: (0, 0)))),
        compiler_params=pltpu.CompilerParams(dimension_semantics=("arbitrary",)),
    )(sub_w_lo, sub_w_hi, inputs_p, w_mm, g_p, seg_p, corr_table, scale, bias)

    # Unpack the lane-dense accumulator: packed row w, lane group k -> segment 8w+k.
    x_max = xmax_packed.reshape(s_pad8 * 8, c_out)[:num_segments]
    if last_layer:
        return x_max

    # y back to the original row order.  The module's group re-concatenation
    # equals a stable sort by points[:, 0]; pcdet produces batch ids pre-sorted,
    # so that permutation is the identity and the original order is the output order.
    # TODO(synk): if unsorted batch ids must be supported, compose the batch-group
    #             permutation into inv_perm here.
    # TODO(synk): fold this gather + concat into a small third kernel that fills
    #             the right half of a pre-allocated (N, 2*c_out) buffer.
    y = y_p[inv_perm]
    return jnp.concatenate([y, x_max[unq_inv]], axis=1)


# ---------------------------- pure-JAX reference ----------------------------

def pfn_layer_v1_reference(params, inputs, unq_inv, points, flag, num_segments,
                           *, alpha, use_norm=True, last_layer=False, eps=1e-3):
    x = jnp.dot(inputs, params["linear_w"], precision=lax.Precision.HIGHEST)
    g = points[:, 0].astype(jnp.int32)
    if use_norm:
        batch_mean = jnp.mean(x, axis=0)
        batch_var = jnp.mean((x - batch_mean) ** 2, axis=0)
        onehot = (g[:, None] == jnp.arange(flag)[None, :]).astype(jnp.float32)
        counts = onehot.sum(axis=0)
        group_mean = (onehot.T @ x) / counts[:, None]
        diff = group_mean - batch_mean[None, :]
        lm = diff @ params["lm_w"].T
        xn = (x - batch_mean[None, :] - alpha * lm[g]) / jnp.sqrt(batch_var + eps)[None, :]
        xn = params["bn_gamma"][None, :] * xn + params["bn_beta"][None, :]
        x = xn[jnp.argsort(g, stable=True)]
    y = jnp.maximum(x, 0.0)
    x_max = jax.ops.segment_max(y, unq_inv, num_segments=num_segments)
    x_max = jnp.where(jnp.isfinite(x_max), x_max, 0.0)   # torch_scatter zero-fill
    if last_layer:
        return x_max
    return jnp.concatenate([y, x_max[unq_inv]], axis=1)


# ----------------------------------- main -----------------------------------

if __name__ == "__main__":
    key = jax.random.PRNGKey(0)
    in_channels, out_channels = 16, 32          # PFNLayerV1(16, 32, alpha, last_layer=False)
    alpha = 0.5
    last_layer = False
    c_out = out_channels // 2                   # 16 (not last layer)
    flag = 2                                    # number of batch entries
    N = 60                                      # total number of points
    num_segments = 8                            # number of unique pillars

    k1, k2, k3, k4, k5, k6 = jax.random.split(key, 6)
    params = {
        "linear_w": 0.2 * jax.random.normal(k1, (in_channels, c_out), jnp.float32),
        "bn_gamma": 1.0 + 0.1 * jax.random.normal(k2, (c_out,), jnp.float32),
        "bn_beta": 0.1 * jax.random.normal(k3, (c_out,), jnp.float32),
        # BatchNorm1d.linear_mean is zero-initialized in __init__; small random
        # values here so the alpha * linear_mean(mean_diff) path is exercised.
        "lm_w": 0.05 * jax.random.normal(k4, (c_out, c_out), jnp.float32),
    }

    inputs = jax.random.normal(k5, (N, in_channels), jnp.float32)
    # points[:, 0] is the batch index (sorted, as produced by batched point clouds).
    batch_ids = jnp.concatenate([jnp.zeros(28, jnp.int32),
                                 jnp.ones(N - 28, jnp.int32)])
    points = jnp.stack([batch_ids] + [jnp.zeros(N, jnp.int32)] * 3, axis=1)
    unq_inv = jax.random.permutation(k6, jnp.arange(N, dtype=jnp.int32) % num_segments)

    ref = pfn_layer_v1_reference(params, inputs, unq_inv, points, flag, num_segments,
                                 alpha=alpha, use_norm=True, last_layer=last_layer)
    ref = jax.block_until_ready(ref)

    # 1) default config: single row block, f32 matmul.
    out = pfn_layer_v1_forward(params, inputs, unq_inv, points, flag, num_segments,
                               alpha=alpha, use_norm=True, last_layer=last_layer,
                               matmul_dtype=jnp.float32)
    out = jax.block_until_ready(out)
    assert out.shape == (N, 2 * c_out), out.shape
    err = float(jnp.max(jnp.abs(out - ref)))
    assert err < 2e-2, f"f32 path max abs err {err}"

    # 2) multi-block grid + multi sub-tile segment sweep + bf16 matmul inputs.
    out_bf = pfn_layer_v1_forward(params, inputs, unq_inv, points, flag, num_segments,
                                  alpha=alpha, use_norm=True, last_layer=last_layer,
                                  tn=16, sub_rows=8, matmul_dtype=jnp.bfloat16)
    out_bf = jax.block_until_ready(out_bf)
    assert out_bf.shape == (N, 2 * c_out), out_bf.shape
    err_bf = float(jnp.max(jnp.abs(out_bf - ref)))
    assert err_bf < 5e-2, f"bf16 path max abs err {err_bf}"

    print("KERNEL_OK")
</pallas_src>

<mosaic_0001>
module attributes {stable_mosaic.version = 11 : i64} {
  func.func @_stats_kernel(%arg0: i32, %arg1: memref<64x16xf32, #tpu.memory_space<vmem>>, %arg2: memref<16x16xf32, #tpu.memory_space<vmem>>, %arg3: memref<64x1xi32, #tpu.memory_space<vmem>>, %arg4: memref<2x16xf32, #tpu.memory_space<vmem>>, %arg5: memref<2x16xf32, #tpu.memory_space<vmem>>) attributes {dimension_semantics = [#tpu.dimension_semantics<arbitrary>], iteration_bounds = array<i64: 1>, scalar_prefetch = 0 : i64, scratch_operands = 0 : i64, tpu.core_type = #tpu.core_type<tc>, window_params = [{transform_indices = @transform_0, window_bounds = array<i64: 64, 16>}, {pipeline_mode = #tpu.pipeline_mode<synchronous>, transform_indices = @transform_1, window_bounds = array<i64: 16, 16>}, {transform_indices = @transform_2, window_bounds = array<i64: 64, 1>}, {pipeline_mode = #tpu.pipeline_mode<synchronous>, transform_indices = @transform_3, window_bounds = array<i64: 2, 16>}, {pipeline_mode = #tpu.pipeline_mode<synchronous>, transform_indices = @transform_4, window_bounds = array<i64: 2, 16>}]} {
    %c0_i32 = arith.constant 0 : i32
    %0 = arith.cmpi eq, %arg0, %c0_i32 : i32
    %1 = arith.extui %0 : i1 to i32
    %c0_i32_0 = arith.constant 0 : i32
    %2 = arith.cmpi ne, %1, %c0_i32_0 : i32
    scf.if %2 {
      %cst_16 = arith.constant 0.000000e+00 : f32
      %21 = vector.broadcast %cst_16 : f32 to vector<2x16xf32>
      %c0_17 = arith.constant 0 : index
      %c0_18 = arith.constant 0 : index
      %22 = vector.load %arg4[%c0_17, %c0_18] : memref<2x16xf32, #tpu.memory_space<vmem>>, vector<2x16xf32>
      tpu.vector_store %arg4[%c0_17, %c0_18], %21 {strides = array<i32>} : memref<2x16xf32, #tpu.memory_space<vmem>>, vector<2x16xf32>,
      %cst_19 = arith.constant 0.000000e+00 : f32
      %23 = vector.broadcast %cst_19 : f32 to vector<2x16xf32>
      %c0_20 = arith.constant 0 : index
      %c0_21 = arith.constant 0 : index
      %24 = vector.load %arg5[%c0_20, %c0_21] : memref<2x16xf32, #tpu.memory_space<vmem>>, vector<2x16xf32>
      tpu.vector_store %arg5[%c0_20, %c0_21], %23 {strides = array<i32>} : memref<2x16xf32, #tpu.memory_space<vmem>>, vector<2x16xf32>,
    } else {
    }
    %c0 = arith.constant 0 : index
    %c0_1 = arith.constant 0 : index
    %3 = vector.load %arg1[%c0, %c0_1] : memref<64x16xf32, #tpu.memory_space<vmem>>, vector<64x16xf32>
    %c0_2 = arith.constant 0 : index
    %c0_3 = arith.constant 0 : index
    %4 = vector.load %arg2[%c0_2, %c0_3] : memref<16x16xf32, #tpu.memory_space<vmem>>, vector<16x16xf32>
    %cst = arith.constant dense<0.000000e+00> : vector<64x16xf32>
    %5 = tpu.matmul %3, %4, %cst {dimension_numbers = #tpu.dot_dimension_numbers<[1], [0], [0], [1], [0, 0, 1, 1], [], []>} : vector<64x16xf32>, vector<16x16xf32>, vector<64x16xf32> -> vector<64x16xf32>
    %c0_4 = arith.constant 0 : index
    %c0_5 = arith.constant 0 : index
    %6 = vector.load %arg3[%c0_4, %c0_5] : memref<64x1xi32, #tpu.memory_space<vmem>>, vector<64x1xi32>
    %7 = tpu.iota {dimensions = array<i32: 1>} : vector<64x2xi32>
    %8 = vector.broadcast %6 : vector<64x1xi32> to vector<64x2xi32>
    %9 = arith.cmpi eq, %8, %7 : vector<64x2xi32>
    %10 = arith.extui %9 : vector<64x2xi1> to vector<64x2xi32>
    %11 = arith.sitofp %10 : vector<64x2xi32> to vector<64x2xf32>
    %c0_6 = arith.constant 0 : index
    %c0_7 = arith.constant 0 : index
    %12 = vector.load %arg4[%c0_6, %c0_7] : memref<2x16xf32, #tpu.memory_space<vmem>>, vector<2x16xf32>
    %cst_8 = arith.constant dense<0.000000e+00> : vector<2x16xf32>
    %13 = tpu.matmul %11, %5, %cst_8 {dimension_numbers = #tpu.dot_dimension_numbers<[0], [0], [1], [1], [0, 1, 1, 1], [], []>} : vector<64x2xf32>, vector<64x16xf32>, vector<2x16xf32> -> vector<2x16xf32>
    %14 = arith.addf %12, %13 : vector<2x16xf32>
    %c0_9 = arith.constant 0 : index
    %c0_10 = arith.constant 0 : index
    %15 = vector.load %arg4[%c0_9, %c0_10] : memref<2x16xf32, #tpu.memory_space<vmem>>, vector<2x16xf32>
    tpu.vector_store %arg4[%c0_9, %c0_10], %14 {strides = array<i32>} : memref<2x16xf32, #tpu.memory_space<vmem>>, vector<2x16xf32>,
    %c0_11 = arith.constant 0 : index
    %c0_12 = arith.constant 0 : index
    %16 = vector.load %arg5[%c0_11, %c0_12] : memref<2x16xf32, #tpu.memory_space<vmem>>, vector<2x16xf32>
    %17 = arith.mulf %5, %5 : vector<64x16xf32>
    %cst_13 = arith.constant dense<0.000000e+00> : vector<2x16xf32>
    %18 = tpu.matmul %11, %17, %cst_13 {dimension_numbers = #tpu.dot_dimension_numbers<[0], [0], [1], [1], [0, 1, 1, 1], [], []>} : vector<64x2xf32>, vector<64x16xf32>, vector<2x16xf32> -> vector<2x16xf32>
    %19 = arith.addf %16, %18 : vector<2x16xf32>
    %c0_14 = arith.constant 0 : index
    %c0_15 = arith.constant 0 : index
    %20 = vector.load %arg5[%c0_14, %c0_15] : memref<2x16xf32, #tpu.memory_space<vmem>>, vector<2x16xf32>
    tpu.vector_store %arg5[%c0_14, %c0_15], %19 {strides = array<i32>} : memref<2x16xf32, #tpu.memory_space<vmem>>, vector<2x16xf32>,
    return
  }
  func.func @transform_0(%arg0: i32) -> (i32, i32) {
    %c0_i32 = arith.constant 0 : i32
    %c0_i32_0 = arith.constant 0 : i32
    return %arg0, %c0_i32 : i32, i32
  }
  func.func @transform_1(%arg0: i32) -> (i32, i32) {
    %c0_i32 = arith.constant 0 : i32
    %c0_i32_0 = arith.constant 0 : i32
    %c0_i32_1 = arith.constant 0 : i32
    return %c0_i32, %c0_i32_0 : i32, i32
  }
  func.func @transform_2(%arg0: i32) -> (i32, i32) {
    %c0_i32 = arith.constant 0 : i32
    %c0_i32_0 = arith.constant 0 : i32
    return %arg0, %c0_i32 : i32, i32
  }
  func.func @transform_3(%arg0: i32) -> (i32, i32) {
    %c0_i32 = arith.constant 0 : i32
    %c0_i32_0 = arith.constant 0 : i32
    %c0_i32_1 = arith.constant 0 : i32
    return %c0_i32, %c0_i32_0 : i32, i32
  }
  func.func @transform_4(%arg0: i32) -> (i32, i32) {
    %c0_i32 = arith.constant 0 : i32
    %c0_i32_0 = arith.constant 0 : i32
    %c0_i32_1 = arith.constant 0 : i32
    return %c0_i32, %c0_i32_0 : i32, i32
  }
}

</mosaic_0001>

<llo_original>
// kernel: tpu_custom_call.1
$region0: #{tpu_custom_call.1}
  #allocation0 [shape = 'u32[]', space=smem, size = 0x4, offset = 0x4, fixed_abs, tag = 'smem constant byte address 0x4 - core index']
  #allocation1 [shape = 'u32[144,128]{1,0:T(1,128)}', space=vmem, size = 0x12000, scoped, tag = 'internal scratch']
  %s0 = inlined_call_operand.vmem [shape: f32[64,16], index: 0, kind: input, shape index: {}]
  %s1 = inlined_call_operand.vmem [shape: f32[16,16], index: 1, kind: input, shape index: {}]
  %s2 = inlined_call_operand.vmem [shape: s32[64,1], index: 2, kind: input, shape index: {}]
  %s3 = inlined_call_operand.hbm [shape: f32[2,16], index: 3, kind: output, shape index: {0}]
  %s4 = inlined_call_operand.hbm [shape: f32[2,16], index: 4, kind: output, shape index: {1}]
  %5 = xla_tuple %s3, %s4
  %s6 = sld [smem:[#allocation0]]
  $region34: #{tpu_custom_call.1} parent=0
    _
  %s8 = ssub.s32 1, %s6
  %s9 = scalar_select 0, %s8, %s6
  $region1: #{tpu_custom_call.1} parent=0
    #allocation2 [shape = 'u8[1024]{0}', space=vmem, size = 0x400, scoped, tag = 'output window, operand 0, single buffered']
    #allocation3 [shape = 's32[1]{0}', space=sflag, size = 0x4, scoped, tag = 'scoped memory for tpu_custom_call.1']
    #allocation4 [shape = 'u8[1024]{0}', space=vmem, size = 0x400, scoped, tag = 'output window, operand 1, single buffered']
    #allocation5 [shape = 's32[1]{0}', space=sflag, size = 0x4, scoped, tag = 'scoped memory for tpu_custom_call.1']
    %10 = vsyncpa [#allocation3], 0
    %11 = vsyncpa [#allocation5], 0
    // Predicated region
    $region2: #{tpu_custom_call.1} parent=1 // pred_check
      _
    $region3: #{tpu_custom_call.1} parent=1 // pred_check_branch
      %13 = sbr.rel (0) target = $region5
    $region4: #{tpu_custom_call.1} parent=1 // pred_region
      _
    $region5: #{tpu_custom_call.1} parent=1 // pred_fallthru
      _
    // Predicated region
    $region6: #{tpu_custom_call.1} parent=1 // pred_check
      _
    $region7: #{tpu_custom_call.1} parent=1 // pred_check_branch
      %15 = sbr.rel (0) target = $region9
    $region8: #{tpu_custom_call.1} parent=1 // pred_region
      _
    $region9: #{tpu_custom_call.1} parent=1 // pred_fallthru
      _
    // Predicated region
    $region10: #{tpu_custom_call.1} parent=1 // pred_check
      _
    $region11: #{tpu_custom_call.1} parent=1 // pred_check_branch
      %17 = sbr.rel (0) target = $region13
    $region12: #{tpu_custom_call.1} parent=1 // pred_region
      _
    $region13: #{tpu_custom_call.1} parent=1 // pred_fallthru
      _
    %p18 = scmp.eq.s32.totalorder 0, 0
    // Predicated region
    $region14: #{tpu_custom_call.1} parent=1 // pred_check
      %p19 = pneg %p18
    $region15: #{tpu_custom_call.1} parent=1 // pred_check_branch
      %21 = sbr.rel (%p19) target = $region17
    $region16: #{tpu_custom_call.1} parent=1 // pred_region
      %vm22 = vcmask 123904
      %23 = vst.msk [vmem:[#allocation2] sm:$0x3] %vm22, 0.0
      %24 = vst.msk [vmem:[#allocation4] sm:$0x3] %vm22, 0.0
    $region17: #{tpu_custom_call.1} parent=1 // pred_fallthru
      _
    %v25 = vld [vmem:[%s0] sm:$0xff]
    %v26 = vld [vmem:[%s0 + $0x8] sm:$0xff]
    %v27 = vld [vmem:[%s0 + $0x10] sm:$0xff]
    %v28 = vld [vmem:[%s0 + $0x18] sm:$0xff]
    %v29 = vld [vmem:[%s0 + $0x20] sm:$0xff]
    %v30 = vld [vmem:[%s0 + $0x28] sm:$0xff]
    %v31 = vld [vmem:[%s0 + $0x30] sm:$0xff]
    %v32 = vld [vmem:[%s0 + $0x38] sm:$0xff]
    %v33 = vld [vmem:[%s1] sm:$0xff]
    %v34 = vld [vmem:[%s1 + $0x8] sm:$0xff]
    %vm35 = vcmask 130048
    %v37 = vsel %vm35, %v25, 0
    %v40 = vsel %vm35, %v26, 0
    %v43 = vsel %vm35, %v27, 0
    %v46 = vsel %vm35, %v28, 0
    %v49 = vsel %vm35, %v29, 0
    %v52 = vsel %vm35, %v30, 0
    %v55 = vsel %vm35, %v31, 0
    %v58 = vsel %vm35, %v32, 0
    %60 = vmatprep.subr.mxu0 0.0
    %61 = vmatpush1.msra.mxu0 0.0
    %62 = vmatprep.subr.mxu0 0.0
    %63 = vmatpush1.msra.mxu0 0.0
    %64 = vmatprep.subr.mxu0 0.0
    %65 = vmatpush1.msra.mxu0 0.0
    %66 = vmatprep.subr.mxu0 0.0
    %67 = vmatpush1.msra.mxu0 0.0
    %68 = vmatprep.subr.mxu0 0.0
    %69 = vmatpush1.msra.mxu0 0.0
    %70 = vmatprep.subr.mxu0 0.0
    %71 = vmatpush1.msra.mxu0 0.0
    %72 = vmatprep.subr.mxu0 0.0
    %73 = vmatpush1.msra.mxu0 0.0
    %74 = vmatprep.subr.mxu0 0.0
    %75 = vmatpush1.msra.mxu0 0.0
    %76 = vmatprep.subr.mxu0 0.0
    %77 = vmatpush1.msra.mxu0 0.0
    %78 = vmatprep.subr.mxu0 0.0
    %79 = vmatpush1.msra.mxu0 0.0
    %80 = vmatprep.subr.mxu0 0.0
    %81 = vmatpush1.msra.mxu0 0.0
    %82 = vmatprep.subr.mxu0 0.0
    %83 = vmatpush1.msra.mxu0 0.0
    %84 = vmatprep.subr.mxu0 0.0
    %85 = vmatpush1.msra.mxu0 0.0
    %86 = vmatprep.subr.mxu0 0.0
    %87 = vmatpush1.msra.mxu0 0.0
    %88 = vmatprep.subr.mxu0 0.0
    %89 = vmatpush1.msra.mxu0 %v34
    %90 = vmatprep.subr.mxu0 0.0
    %91 = vmatpush1.msra.mxu0 %v33
    %92 = vmatprep.subr.mxu0 0.0
    %93 = vmatpush2.msra.mxu0 0.0
    %94 = vmatprep.subr.mxu0 0.0
    %95 = vmatpush2.msra.mxu0 0.0
    %96 = vmatprep.subr.mxu0 0.0
    %97 = vmatpush2.msra.mxu0 0.0
    %98 = vmatprep.subr.mxu0 0.0
    %99 = vmatpush2.msra.mxu0 0.0
    %100 = vmatprep.subr.mxu0 0.0
    %101 = vmatpush2.msra.mxu0 0.0
    %102 = vmatprep.subr.mxu0 0.0
    %103 = vmatpush2.msra.mxu0 0.0
    %104 = vmatprep.subr.mxu0 0.0
    %105 = vmatpush2.msra.mxu0 0.0
    %106 = vmatprep.subr.mxu0 0.0
    %107 = vmatpush2.msra.mxu0 0.0
    %108 = vmatprep.subr.mxu0 0.0
    %109 = vmatpush2.msra.mxu0 0.0
    %110 = vmatprep.subr.mxu0 0.0
    %111 = vmatpush2.msra.mxu0 0.0
    %112 = vmatprep.subr.mxu0 0.0
    %113 = vmatpush2.msra.mxu0 0.0
    %114 = vmatprep.subr.mxu0 0.0
    %115 = vmatpush2.msra.mxu0 0.0
    %116 = vmatprep.subr.mxu0 0.0
    %117 = vmatpush2.msra.mxu0 0.0
    %118 = vmatprep.subr.mxu0 0.0
    %119 = vmatpush2.msra.mxu0 0.0
    %120 = vmatprep.subr.mxu0 0.0
    %121 = vmatpush2.msra.mxu0 0.0
    %122 = vmatprep.subr.mxu0 0.0
    %123 = vmatpush2.msra.mxu0 0.0
    %124 = vmatprep.mubr.f32.mxu0 0.0
    %125 = vmatmul.mubr.f32.gmra.mxu0 %v37
    %v126 = vpop.f32.mrf.mxu0
    %v127 = vadd.f32 0.0, %v126
    %v128 = vpop.f32.mrf.mxu0
    %129 = vmatprep.mubr.f32.mxu0 0.0
    %130 = vmatmul.mubr.f32.gmra.mxu0 %v40
    %v131 = vpop.f32.mrf.mxu0
    %v132 = vadd.f32 0.0, %v131
    %v133 = vpop.f32.mrf.mxu0
    %134 = vmatprep.mubr.f32.mxu0 0.0
    %135 = vmatmul.mubr.f32.gmra.mxu0 %v43
    %v136 = vpop.f32.mrf.mxu0
    %v137 = vadd.f32 0.0, %v136
    %v138 = vpop.f32.mrf.mxu0
    %139 = vmatprep.mubr.f32.mxu0 0.0
    %140 = vmatmul.mubr.f32.gmra.mxu0 %v46
    %v141 = vpop.f32.mrf.mxu0
    %v142 = vadd.f32 0.0, %v141
    %v143 = vpop.f32.mrf.mxu0
    %144 = vmatprep.mubr.f32.mxu0 0.0
    %145 = vmatmul.mubr.f32.gmra.mxu0 %v49
    %v146 = vpop.f32.mrf.mxu0
    %v147 = vadd.f32 0.0, %v146
    %v148 = vpop.f32.mrf.mxu0
    %149 = vmatprep.mubr.f32.mxu0 0.0
    %150 = vmatmul.mubr.f32.gmra.mxu0 %v52
    %v151 = vpop.f32.mrf.mxu0
    %v152 = vadd.f32 0.0, %v151
    %v153 = vpop.f32.mrf.mxu0
    %154 = vmatprep.mubr.f32.mxu0 0.0
    %155 = vmatmul.mubr.f32.gmra.mxu0 %v55
    %v156 = vpop.f32.mrf.mxu0
    %v157 = vadd.f32 0.0, %v156
    %v158 = vpop.f32.mrf.mxu0
    %159 = vmatprep.mubr.f32.mxu0 0.0
    %160 = vmatmul.mubr.f32.gmra.mxu0 %v58
    %v161 = vpop.f32.mrf.mxu0
    %v162 = vadd.f32 0.0, %v161
    %v163 = vpop.f32.mrf.mxu0
    %164 = vdwg.mxu0
    %v165 = vld [vmem:[%s2] sm:$0xff]
    %v166 = vld [vmem:[%s2 + $0x8] sm:$0xff]
    %v167 = vld [vmem:[%s2 + $0x10] sm:$0xff]
    %v168 = vld [vmem:[%s2 + $0x18] sm:$0xff]
    %v169 = vld [vmem:[%s2 + $0x20] sm:$0xff]
    %v170 = vld [vmem:[%s2 + $0x28] sm:$0xff]
    %v171 = vld [vmem:[%s2 + $0x30] sm:$0xff]
    %v172 = vld [vmem:[%s2 + $0x38] sm:$0xff]
    %v173 = vlaneseq
    %v174 = vand.u32 %v173, 127
    %175 = vset.pattern.permute.xlu0 0
    %176 = vperm.xlu0 %175, %v165
    %v177 = vpop.permute.xlu0 %176
    %178 = vset.pattern.permute.xlu0 0
    %179 = vperm.xlu0 %178, %v166
    %v180 = vpop.permute.xlu0 %179
    %181 = vset.pattern.permute.xlu0 0
    %182 = vperm.xlu0 %181, %v167
    %v183 = vpop.permute.xlu0 %182
    %184 = vset.pattern.permute.xlu0 0
    %185 = vperm.xlu0 %184, %v168
    %v186 = vpop.permute.xlu0 %185
    %187 = vset.pattern.permute.xlu0 0
    %188 = vperm.xlu0 %187, %v169
    %v189 = vpop.permute.xlu0 %188
    %190 = vset.pattern.permute.xlu0 0
    %191 = vperm.xlu0 %190, %v170
    %v192 = vpop.permute.xlu0 %191
    %193 = vset.pattern.permute.xlu0 0
    %194 = vperm.xlu0 %193, %v171
    %v195 = vpop.permute.xlu0 %194
    %196 = vset.pattern.permute.xlu0 0
    %197 = vperm.xlu0 %196, %v172
    %v198 = vpop.permute.xlu0 %197
    %vm199 = vcmp.eq.s32.totalorder %v177, %v174
    %vm200 = vcmp.eq.s32.totalorder %v180, %v174
    %vm201 = vcmp.eq.s32.totalorder %v183, %v174
    %vm202 = vcmp.eq.s32.totalorder %v186, %v174
    %vm203 = vcmp.eq.s32.totalorder %v189, %v174
    %vm204 = vcmp.eq.s32.totalorder %v192, %v174
    %vm205 = vcmp.eq.s32.totalorder %v195, %v174
    %vm206 = vcmp.eq.s32.totalorder %v198, %v174
    %v207 = vsel %vm199, 1, 0
    %v208 = vsel %vm200, 1, 0
    %v209 = vsel %vm201, 1, 0
    %v210 = vsel %vm202, 1, 0
    %v211 = vsel %vm203, 1, 0
    %v212 = vsel %vm204, 1, 0
    %v213 = vsel %vm205, 1, 0
    %v214 = vsel %vm206, 1, 0
    %v215 = vcvt.s32.f32 %v207
    %v216 = vcvt.s32.f32 %v208
    %v217 = vcvt.s32.f32 %v209
    %v218 = vcvt.s32.f32 %v210
    %v219 = vcvt.s32.f32 %v211
    %v220 = vcvt.s32.f32 %v212
    %v221 = vcvt.s32.f32 %v213
    %v222 = vcvt.s32.f32 %v214
    %v223 = vld [vmem:[#allocation2] sm:$0x3]
    %224 = vxpose.xlu0.b32.start [1/16] %v215, 128
    %225 = vxpose.xlu0.b32.cont [2/16] %v216, 128
    %226 = vxpose.xlu0.b32.cont [3/16] %v217, 128
    %227 = vxpose.xlu0.b32.cont [4/16] %v218, 128
    %228 = vxpose.xlu0.b32.cont [5/16] %v219, 128
    %229 = vxpose.xlu0.b32.cont [6/16] %v220, 128
    %230 = vxpose.xlu0.b32.cont [7/16] %v221, 128
    %231 = vxpose.xlu0.b32.cont [8/16] %v222, 128
    %232 = vxpose.xlu0.b32.cont [9/16] 0.0, 128
    %233 = vxpose.xlu0.b32.cont [10/16] 0.0, 128
    %234 = vxpose.xlu0.b32.cont [11/16] 0.0, 128
    %235 = vxpose.xlu0.b32.cont [12/16] 0.0, 128
    %236 = vxpose.xlu0.b32.cont [13/16] 0.0, 128
    %237 = vxpose.xlu0.b32.cont [14/16] 0.0, 128
    %238 = vxpose.xlu0.b32.cont [15/16] 0.0, 128
    %239 = vxpose.xlu0.b32.end [16/16] 0.0, 128
    %v240 = vpop.trf.xlu0
    %v241 = vpop.trf.xlu0
    %v242 = vpop.trf.xlu0
    %v243 = vpop.trf.xlu0
    %v244 = vpop.trf.xlu0
    %v245 = vpop.trf.xlu0
    %v246 = vpop.trf.xlu0
    %v247 = vpop.trf.xlu0
    %v248 = vpop.trf.xlu0
    %v249 = vpop.trf.xlu0
    %v250 = vpop.trf.xlu0
    %v251 = vpop.trf.xlu0
    %v252 = vpop.trf.xlu0
    %v253 = vpop.trf.xlu0
    %v254 = vpop.trf.xlu0
    %v255 = vpop.trf.xlu0
    %vm256 = vcmask 523264
    %v258 = vsel %vm256, %v240, 0
    %260 = vmatprep.subr.mxu0 0.0
    %261 = vmatpush1.msra.mxu0 0.0
    %262 = vmatprep.subr.mxu0 0.0
    %263 = vmatpush1.msra.mxu0 0.0
    %264 = vmatprep.subr.mxu0 0.0
    %265 = vmatpush1.msra.mxu0 0.0
    %266 = vmatprep.subr.mxu0 0.0
    %267 = vmatpush1.msra.mxu0 0.0
    %268 = vmatprep.subr.mxu0 0.0
    %269 = vmatpush1.msra.mxu0 0.0
    %270 = vmatprep.subr.mxu0 0.0
    %271 = vmatpush1.msra.mxu0 0.0
    %272 = vmatprep.subr.mxu0 0.0
    %273 = vmatpush1.msra.mxu0 0.0
    %274 = vmatprep.subr.mxu0 0.0
    %275 = vmatpush1.msra.mxu0 0.0
    %276 = vmatprep.subr.mxu0 0.0
    %277 = vmatpush1.msra.mxu0 %v162
    %278 = vmatprep.subr.mxu0 0.0
    %279 = vmatpush1.msra.mxu0 %v157
    %280 = vmatprep.subr.mxu0 0.0
    %281 = vmatpush1.msra.mxu0 %v152
    %282 = vmatprep.subr.mxu0 0.0
    %283 = vmatpush1.msra.mxu0 %v147
    %284 = vmatprep.subr.mxu0 0.0
    %285 = vmatpush1.msra.mxu0 %v142
    %286 = vmatprep.subr.mxu0 0.0
    %287 = vmatpush1.msra.mxu0 %v137
    %288 = vmatprep.subr.mxu0 0.0
    %289 = vmatpush1.msra.mxu0 %v132
    %290 = vmatprep.subr.mxu0 0.0
    %291 = vmatpush1.msra.mxu0 %v127
    %292 = vmatprep.subr.mxu0 0.0
    %293 = vmatpush2.msra.mxu0 0.0
    %294 = vmatprep.subr.mxu0 0.0
    %295 = vmatpush2.msra.mxu0 0.0
    %296 = vmatprep.subr.mxu0 0.0
    %297 = vmatpush2.msra.mxu0 0.0
    %298 = vmatprep.subr.mxu0 0.0
    %299 = vmatpush2.msra.mxu0 0.0
    %300 = vmatprep.subr.mxu0 0.0
    %301 = vmatpush2.msra.mxu0 0.0
    %302 = vmatprep.subr.mxu0 0.0
    %303 = vmatpush2.msra.mxu0 0.0
    %304 = vmatprep.subr.mxu0 0.0
    %305 = vmatpush2.msra.mxu0 0.0
    %306 = vmatprep.subr.mxu0 0.0
    %307 = vmatpush2.msra.mxu0 0.0
    %308 = vmatprep.subr.mxu0 0.0
    %309 = vmatpush2.msra.mxu0 0.0
    %310 = vmatprep.subr.mxu0 0.0
    %311 = vmatpush2.msra.mxu0 0.0
    %312 = vmatprep.subr.mxu0 0.0
    %313 = vmatpush2.msra.mxu0 0.0
    %314 = vmatprep.subr.mxu0 0.0
    %315 = vmatpush2.msra.mxu0 0.0
    %316 = vmatprep.subr.mxu0 0.0
    %317 = vmatpush2.msra.mxu0 0.0
    %318 = vmatprep.subr.mxu0 0.0
    %319 = vmatpush2.msra.mxu0 0.0
    %320 = vmatprep.subr.mxu0 0.0
    %321 = vmatpush2.msra.mxu0 0.0
    %322 = vmatprep.subr.mxu0 0.0
    %323 = vmatpush2.msra.mxu0 0.0
    %324 = vmatprep.mubr.f32.mxu0 0.0
    %325 = vmatmul.mubr.f32.gmra.mxu0 %v258
    %v326 = vpop.f32.mrf.mxu0
    %v327 = vadd.f32 0.0, %v326
    %v328 = vpop.f32.mrf.mxu0
    %329 = vdwg.mxu0
    %v330 = vadd.f32 %v223, %v327
    %vm331 = vcmask 123904
    %332 = vst.msk [vmem:[#allocation2] sm:$0x3] %vm331, %v330
    %v333 = vld [vmem:[#allocation4] sm:$0x3]
    %v334 = vmul.f32 %v127, %v127
    %v335 = vmul.f32 %v132, %v132
    %v336 = vmul.f32 %v137, %v137
    %v337 = vmul.f32 %v142, %v142
    %v338 = vmul.f32 %v147, %v147
    %v339 = vmul.f32 %v152, %v152
    %v340 = vmul.f32 %v157, %v157
    %v341 = vmul.f32 %v162, %v162
    %342 = vmatprep.subr.mxu0 0.0
    %343 = vmatpush1.msra.mxu0 0.0
    %344 = vmatprep.subr.mxu0 0.0
    %345 = vmatpush1.msra.mxu0 0.0
    %346 = vmatprep.subr.mxu0 0.0
    %347 = vmatpush1.msra.mxu0 0.0
    %348 = vmatprep.subr.mxu0 0.0
    %349 = vmatpush1.msra.mxu0 0.0
    %350 = vmatprep.subr.mxu0 0.0
    %351 = vmatpush1.msra.mxu0 0.0
    %352 = vmatprep.subr.mxu0 0.0
    %353 = vmatpush1.msra.mxu0 0.0
    %354 = vmatprep.subr.mxu0 0.0
    %355 = vmatpush1.msra.mxu0 0.0
    %356 = vmatprep.subr.mxu0 0.0
    %357 = vmatpush1.msra.mxu0 0.0
    %358 = vmatprep.subr.mxu0 0.0
    %359 = vmatpush1.msra.mxu0 %v341
    %360 = vmatprep.subr.mxu0 0.0
    %361 = vmatpush1.msra.mxu0 %v340
    %362 = vmatprep.subr.mxu0 0.0
    %363 = vmatpush1.msra.mxu0 %v339
    %364 = vmatprep.subr.mxu0 0.0
    %365 = vmatpush1.msra.mxu0 %v338
    %366 = vmatprep.subr.mxu0 0.0
    %367 = vmatpush1.msra.mxu0 %v337
    %368 = vmatprep.subr.mxu0 0.0
    %369 = vmatpush1.msra.mxu0 %v336
    %370 = vmatprep.subr.mxu0 0.0
    %371 = vmatpush1.msra.mxu0 %v335
    %372 = vmatprep.subr.mxu0 0.0
    %373 = vmatpush1.msra.mxu0 %v334
    %374 = vmatprep.subr.mxu0 0.0
    %375 = vmatpush2.msra.mxu0 0.0
    %376 = vmatprep.subr.mxu0 0.0
    %377 = vmatpush2.msra.mxu0 0.0
    %378 = vmatprep.subr.mxu0 0.0
    %379 = vmatpush2.msra.mxu0 0.0
    %380 = vmatprep.subr.mxu0 0.0
    %381 = vmatpush2.msra.mxu0 0.0
    %382 = vmatprep.subr.mxu0 0.0
    %383 = vmatpush2.msra.mxu0 0.0
    %384 = vmatprep.subr.mxu0 0.0
    %385 = vmatpush2.msra.mxu0 0.0
    %386 = vmatprep.subr.mxu0 0.0
    %387 = vmatpush2.msra.mxu0 0.0
    %388 = vmatprep.subr.mxu0 0.0
    %389 = vmatpush2.msra.mxu0 0.0
    %390 = vmatprep.subr.mxu0 0.0
    %391 = vmatpush2.msra.mxu0 0.0
    %392 = vmatprep.subr.mxu0 0.0
    %393 = vmatpush2.msra.mxu0 0.0
    %394 = vmatprep.subr.mxu0 0.0
    %395 = vmatpush2.msra.mxu0 0.0
    %396 = vmatprep.subr.mxu0 0.0
    %397 = vmatpush2.msra.mxu0 0.0
    %398 = vmatprep.subr.mxu0 0.0
    %399 = vmatpush2.msra.mxu0 0.0
    %400 = vmatprep.subr.mxu0 0.0
    %401 = vmatpush2.msra.mxu0 0.0
    %402 = vmatprep.subr.mxu0 0.0
    %403 = vmatpush2.msra.mxu0 0.0
    %404 = vmatprep.subr.mxu0 0.0
    %405 = vmatpush2.msra.mxu0 0.0
    %406 = vmatprep.mubr.f32.mxu0 0.0
    %407 = vmatmul.mubr.f32.gmra.mxu0 %v258
    %v408 = vpop.f32.mrf.mxu0
    %v409 = vadd.f32 0.0, %v408
    %v410 = vpop.f32.mrf.mxu0
    %411 = vdwg.mxu0
    %v412 = vadd.f32 %v333, %v409
    %413 = vst.msk [vmem:[#allocation4] sm:$0x3] %vm331, %v412
    // Predicated region
    $region18: #{tpu_custom_call.1} parent=1 // pred_check
      _
    $region19: #{tpu_custom_call.1} parent=1 // pred_check_branch
      %415 = sbr.rel (0) target = $region21
    $region20: #{tpu_custom_call.1} parent=1 // pred_region
      %s417 = ssub.s32 32, 32
      %418 = vsyncadd [#allocation3], %s417
      %s420 = sshll.u32 [#allocation2], 4
      %s421 = int_to_ptr.vmem [resolvable:$true] %s420
      %423 = dma.vmem_to_hbm [thread:$0]  %s421, 32, %s3, [#allocation3]
    $region21: #{tpu_custom_call.1} parent=1 // pred_fallthru
      _
    // Predicated region
    $region22: #{tpu_custom_call.1} parent=1 // pred_check
      _
    $region23: #{tpu_custom_call.1} parent=1 // pred_check_branch
      %425 = sbr.rel (0) target = $region25
    $region24: #{tpu_custom_call.1} parent=1 // pred_region
      %s427 = ssub.s32 32, 32
      %428 = vsyncadd [#allocation5], %s427
      %s430 = sshll.u32 [#allocation4], 4
      %s431 = int_to_ptr.vmem [resolvable:$true] %s430
      %433 = dma.vmem_to_hbm [thread:$0]  %s431, 32, %s4, [#allocation5]
    $region25: #{tpu_custom_call.1} parent=1 // pred_fallthru
      _
    // Predicated region
    $region26: #{tpu_custom_call.1} parent=1 // pred_check
      _
    $region27: #{tpu_custom_call.1} parent=1 // pred_check_branch
      %435 = sbr.rel (0) target = $region29
    $region28: #{tpu_custom_call.1} parent=1 // pred_region
      %436 = dma.done [#allocation3], 32
    $region29: #{tpu_custom_call.1} parent=1 // pred_fallthru
      _
    // Predicated region
    $region30: #{tpu_custom_call.1} parent=1 // pred_check
      _
    $region31: #{tpu_custom_call.1} parent=1 // pred_check_branch
      %438 = sbr.rel (0) target = $region33
    $region32: #{tpu_custom_call.1} parent=1 // pred_region
      %439 = dma.done [#allocation5], 32
    $region33: #{tpu_custom_call.1} parent=1 // pred_fallthru
      _
    %440 = vsyncpa [#allocation3], 1
    %441 = vsyncpa [#allocation5], 1

</llo_original>
